<compile_context>
chip_gen: v7x
topology: tpu7x:2x2x1
jax: 0.10.0
libtpu: 0.0.40
codegen_flags: <defaults>
</compile_context>

<pallas_src>
import functools
import math

import jax
import jax.numpy as jnp
from jax.experimental import pallas as pl
from jax.experimental.pallas import tpu as pltpu


def _round_up(x: int, m: int) -> int:
    return (x + m - 1) // m * m


def encoder_kernel(tok_ref, wgt_ref, emb_ref, w_ref, b_ref, out_ref, acc_ref):
    """Grid = (batch tiles [parallel], vocab tiles [arbitrary/reduction])."""
    kv = pl.program_id(1)

    @pl.when(kv == 0)
    def _init():
        acc_ref[...] = jnp.zeros_like(acc_ref)

    tok = tok_ref[...]                      # (TB, S) int32 token ids
    wgt = wgt_ref[...]                      # (TB, S) f32   mask / clamped len
    tb, seq = tok.shape
    tv = emb_ref.shape[0]

    # Vocab ids covered by this table tile.
    v_ids = kv * tv + jax.lax.broadcasted_iota(jnp.int32, (tb, tv), 1)

    # Masked, length-normalized count matrix:
    #   counts[b, v] = sum_s [tok[b, s] == v] * wgt[b, s]
    # Built as S small 2-D compares; live vreg pressure stays O(TB*TV).
    counts = jnp.zeros((tb, tv), jnp.float32)
    for s in range(seq):                    # static unroll; S is small
        counts = counts + jnp.where(tok[:, s:s + 1] == v_ids,
                                    wgt[:, s:s + 1], 0.0)

    # pooled += counts @ table  (bf16 MXU operands, f32 accumulation).
    acc_ref[...] += jnp.dot(counts.astype(emb_ref.dtype), emb_ref[...],
                            preferred_element_type=jnp.float32)

    @pl.when(kv == pl.num_programs(1) - 1)
    def _finalize():
        z = jnp.dot(acc_ref[...], w_ref[...],
                    preferred_element_type=jnp.float32)
        out_ref[...] = (z + b_ref[...]).astype(out_ref.dtype)


@functools.partial(jax.jit, static_argnames=("param_dtype",))
def encoder_forward(tokens, lens, emb_table, w_lat, b_lat,
                    *, param_dtype=jnp.bfloat16):
    """tokens: [B,S] int, lens: [B] int -> latent [B, latent_dim] f32."""
    B, S = tokens.shape
    V, E = emb_table.shape
    L = w_lat.shape[1]

    TB = min(128, _round_up(B, 8))          # batch tile (sublane multiple)
    TV = min(512, _round_up(V, 128))        # vocab tile (streamed reduction)
    B_pad = _round_up(B, TB)
    V_pad = _round_up(V, TV)
    E_pad = _round_up(E, 128)               # lane-dense matmul dims
    L_pad = _round_up(L, 128)               # lane-dense output store

    # --- wrapper-side padding / layout plumbing (all tiny) ------------------
    tok_p = jnp.full((B_pad, S), -1, jnp.int32).at[:B].set(
        tokens.astype(jnp.int32))
    # Fold pad mask and mean denominator into one lane-replicated (B,S) weight
    # (keeps lens out of the kernel; clamps lens to [1, S]).
    lens_c = jnp.clip(lens.astype(jnp.int32), 0, S)
    pos = jnp.arange(S, dtype=jnp.int32)[None, :]
    wgt = ((pos < lens_c[:, None]).astype(jnp.float32)
           / jnp.maximum(lens_c[:, None], 1).astype(jnp.float32))
    wgt_p = jnp.zeros((B_pad, S), jnp.float32).at[:B].set(wgt)

    emb_p = jnp.zeros((V_pad, E_pad), param_dtype).at[:V, :E].set(
        emb_table.astype(param_dtype))
    w_p = jnp.zeros((E_pad, L_pad), jnp.float32).at[:E, :L].set(
        w_lat.astype(jnp.float32))
    b_p = jnp.zeros((1, L_pad), jnp.float32).at[0, :L].set(
        b_lat.astype(jnp.float32))

    grid = (B_pad // TB, V_pad // TV)

    # VMEM budget from the actual tile footprint (double-buffered inputs +
    # output + accumulator) plus headroom — never the full physical VMEM.
    def nbytes(shape, dtype):
        return math.prod(shape) * jnp.dtype(dtype).itemsize

    blk = (nbytes((TB, S), jnp.int32) + nbytes((TB, S), jnp.float32)
           + nbytes((TV, E_pad), param_dtype)
           + nbytes((E_pad, L_pad), jnp.float32)
           + nbytes((1, L_pad), jnp.float32)
           + nbytes((TB, L_pad), jnp.float32))
    vmem_limit = 2 * blk + nbytes((TB, E_pad), jnp.float32) + (4 << 20)

    out_p = pl.pallas_call(
        encoder_kernel,
        out_shape=jax.ShapeDtypeStruct((B_pad, L_pad), jnp.float32),
        grid_spec=pltpu.PrefetchScalarGridSpec(
            num_scalar_prefetch=0,
            grid=grid,
            in_specs=[
                pl.BlockSpec((TB, S), lambda i, k: (i, 0)),         # tokens
                pl.BlockSpec((TB, S), lambda i, k: (i, 0)),         # mask/len
                pl.BlockSpec((TV, E_pad), lambda i, k: (k, 0)),     # emb table
                pl.BlockSpec((E_pad, L_pad), lambda i, k: (0, 0)),  # latent W
                pl.BlockSpec((1, L_pad), lambda i, k: (0, 0)),      # latent b
            ],
            out_specs=pl.BlockSpec((TB, L_pad), lambda i, k: (i, 0)),
            scratch_shapes=[pltpu.VMEM((TB, E_pad), jnp.float32)],
        ),
        compiler_params=pltpu.CompilerParams(
            dimension_semantics=("parallel", "arbitrary"),
            vmem_limit_bytes=int(vmem_limit),
        ),
    )(tok_p, wgt_p, emb_p, w_p, b_p)

    return out_p[:B, :L]


if __name__ == "__main__":
    # Small shapes consistent with the module's __init__.
    vocab_dim = 32
    embedding_dim = 16
    latent_dim = 8
    max_sequence_length = 8
    batch = 2
    sos_index, eos_index, pad_index, unk_index = 1, 2, 0, 3  # stored metadata

    key = jax.random.PRNGKey(0)
    k_emb, k_w, k_b, k_tok, k_len = jax.random.split(key, 5)

    # Deterministic synthetic parameters (shapes from __init__).
    emb_table = jax.random.normal(k_emb, (vocab_dim, embedding_dim), jnp.float32)
    w_lat = jax.random.normal(k_w, (embedding_dim, latent_dim), jnp.float32) * 0.1
    b_lat = jax.random.normal(k_b, (latent_dim,), jnp.float32) * 0.01

    # Example inputs: token ids [B, S] and sequence lengths [B].
    tokens = jax.random.randint(k_tok, (batch, max_sequence_length), 0,
                                vocab_dim, dtype=jnp.int32)
    lens = jax.random.randint(k_len, (batch,), 1, max_sequence_length + 1,
                              dtype=jnp.int32)

    out = encoder_forward(tokens, lens, emb_table, w_lat, b_lat)
    jax.block_until_ready(out)

    # Pure-JAX f32 reference of the same semantics.
    emb = emb_table[tokens]                                        # (B,S,E)
    mask = (jnp.arange(max_sequence_length)[None, :] < lens[:, None]
            ).astype(jnp.float32)
    pooled = (emb * mask[:, :, None]).sum(1) / jnp.maximum(
        lens[:, None].astype(jnp.float32), 1.0)
    ref = pooled @ w_lat + b_lat

    assert out.shape == (batch, latent_dim)
    # Table + count operands are bf16 on the MXU (f32 accumulation); expected
    # deviation from the pure-f32 reference is ~1e-3 absolute at these scales.
    assert jnp.allclose(out, ref, atol=2e-2, rtol=2e-2), (
        float(jnp.max(jnp.abs(out - ref))))

    print("KERNEL_OK")
</pallas_src>

<mosaic_0001>
module attributes {stable_mosaic.version = 11 : i64} {
  func.func @encoder_kernel(%arg0: i32, %arg1: i32, %arg2: memref<8x8xi32, #tpu.memory_space<vmem>>, %arg3: memref<8x8xf32, #tpu.memory_space<vmem>>, %arg4: memref<128x128xbf16, #tpu.memory_space<vmem>>, %arg5: memref<128x128xf32, #tpu.memory_space<vmem>>, %arg6: memref<1x128xf32, #tpu.memory_space<vmem>>, %arg7: memref<8x128xf32, #tpu.memory_space<vmem>>, %arg8: memref<8x128xf32, #tpu.memory_space<vmem>>) attributes {dimension_semantics = [#tpu.dimension_semantics<parallel>, #tpu.dimension_semantics<arbitrary>], iteration_bounds = array<i64: 1, 1>, scalar_prefetch = 0 : i64, scratch_operands = 1 : i64, tpu.core_type = #tpu.core_type<tc>, window_params = [{transform_indices = @transform_0, window_bounds = array<i64: 8, 8>}, {transform_indices = @transform_1, window_bounds = array<i64: 8, 8>}, {transform_indices = @transform_2, window_bounds = array<i64: 128, 128>}, {pipeline_mode = #tpu.pipeline_mode<synchronous>, transform_indices = @transform_3, window_bounds = array<i64: 128, 128>}, {pipeline_mode = #tpu.pipeline_mode<synchronous>, transform_indices = @transform_4, window_bounds = array<i64: 1, 128>}, {transform_indices = @transform_5, window_bounds = array<i64: 8, 128>}]} {
    %c0_i32 = arith.constant 0 : i32
    %0 = arith.cmpi eq, %arg1, %c0_i32 : i32
    %1 = arith.extui %0 : i1 to i32
    %c0_i32_0 = arith.constant 0 : i32
    %2 = arith.cmpi ne, %1, %c0_i32_0 : i32
    scf.if %2 {
      %cst_21 = arith.constant 0.000000e+00 : f32
      %91 = vector.broadcast %cst_21 : f32 to vector<8x128xf32>
      %c0_22 = arith.constant 0 : index
      %c0_23 = arith.constant 0 : index
      %92 = vector.load %arg8[%c0_22, %c0_23] : memref<8x128xf32, #tpu.memory_space<vmem>>, vector<8x128xf32>
      tpu.vector_store %arg8[%c0_22, %c0_23], %91 {strides = array<i32>} : memref<8x128xf32, #tpu.memory_space<vmem>>, vector<8x128xf32>,
    } else {
    }
    %c0 = arith.constant 0 : index
    %c0_1 = arith.constant 0 : index
    %3 = vector.load %arg2[%c0, %c0_1] : memref<8x8xi32, #tpu.memory_space<vmem>>, vector<8x8xi32>
    %c0_2 = arith.constant 0 : index
    %c0_3 = arith.constant 0 : index
    %4 = vector.load %arg3[%c0_2, %c0_3] : memref<8x8xf32, #tpu.memory_space<vmem>>, vector<8x8xf32>
    %c128_i32 = arith.constant 128 : i32
    %5 = arith.muli %arg1, %c128_i32 : i32
    %6 = tpu.iota {dimensions = array<i32: 1>} : vector<8x128xi32>
    %7 = vector.broadcast %5 : i32 to vector<8x128xi32>
    %8 = arith.addi %7, %6 : vector<8x128xi32>
    %cst = arith.constant 0.000000e+00 : f32
    %9 = vector.broadcast %cst : f32 to vector<8x128xf32>
    %10 = vector.extract_strided_slice %3 {offsets = [0, 0], sizes = [8, 1], strides = [1, 1]} : vector<8x8xi32> to vector<8x1xi32>
    %11 = vector.broadcast %10 : vector<8x1xi32> to vector<8x128xi32>
    %12 = arith.cmpi eq, %11, %8 : vector<8x128xi32>
    %13 = vector.extract_strided_slice %4 {offsets = [0, 0], sizes = [8, 1], strides = [1, 1]} : vector<8x8xf32> to vector<8x1xf32>
    %cst_4 = arith.constant 0.000000e+00 : f32
    %14 = vector.shape_cast %13 : vector<8x1xf32> to vector<8x1xf32>
    %15 = vector.broadcast %14 : vector<8x1xf32> to vector<8x128xf32>
    %16 = vector.broadcast %cst_4 : f32 to vector<8x128xf32>
    %17 = arith.select %12, %15, %16 : vector<8x128xi1>, vector<8x128xf32>
    %18 = arith.addf %9, %17 : vector<8x128xf32>
    %19 = vector.extract_strided_slice %3 {offsets = [0, 1], sizes = [8, 1], strides = [1, 1]} : vector<8x8xi32> to vector<8x1xi32>
    %20 = vector.broadcast %19 : vector<8x1xi32> to vector<8x128xi32>
    %21 = arith.cmpi eq, %20, %8 : vector<8x128xi32>
    %22 = vector.extract_strided_slice %4 {offsets = [0, 1], sizes = [8, 1], strides = [1, 1]} : vector<8x8xf32> to vector<8x1xf32>
    %cst_5 = arith.constant 0.000000e+00 : f32
    %23 = vector.shape_cast %22 : vector<8x1xf32> to vector<8x1xf32>
    %24 = vector.broadcast %23 : vector<8x1xf32> to vector<8x128xf32>
    %25 = vector.broadcast %cst_5 : f32 to vector<8x128xf32>
    %26 = arith.select %21, %24, %25 : vector<8x128xi1>, vector<8x128xf32>
    %27 = arith.addf %18, %26 : vector<8x128xf32>
    %28 = vector.extract_strided_slice %3 {offsets = [0, 2], sizes = [8, 1], strides = [1, 1]} : vector<8x8xi32> to vector<8x1xi32>
    %29 = vector.broadcast %28 : vector<8x1xi32> to vector<8x128xi32>
    %30 = arith.cmpi eq, %29, %8 : vector<8x128xi32>
    %31 = vector.extract_strided_slice %4 {offsets = [0, 2], sizes = [8, 1], strides = [1, 1]} : vector<8x8xf32> to vector<8x1xf32>
    %cst_6 = arith.constant 0.000000e+00 : f32
    %32 = vector.shape_cast %31 : vector<8x1xf32> to vector<8x1xf32>
    %33 = vector.broadcast %32 : vector<8x1xf32> to vector<8x128xf32>
    %34 = vector.broadcast %cst_6 : f32 to vector<8x128xf32>
    %35 = arith.select %30, %33, %34 : vector<8x128xi1>, vector<8x128xf32>
    %36 = arith.addf %27, %35 : vector<8x128xf32>
    %37 = vector.extract_strided_slice %3 {offsets = [0, 3], sizes = [8, 1], strides = [1, 1]} : vector<8x8xi32> to vector<8x1xi32>
    %38 = vector.broadcast %37 : vector<8x1xi32> to vector<8x128xi32>
    %39 = arith.cmpi eq, %38, %8 : vector<8x128xi32>
    %40 = vector.extract_strided_slice %4 {offsets = [0, 3], sizes = [8, 1], strides = [1, 1]} : vector<8x8xf32> to vector<8x1xf32>
    %cst_7 = arith.constant 0.000000e+00 : f32
    %41 = vector.shape_cast %40 : vector<8x1xf32> to vector<8x1xf32>
    %42 = vector.broadcast %41 : vector<8x1xf32> to vector<8x128xf32>
    %43 = vector.broadcast %cst_7 : f32 to vector<8x128xf32>
    %44 = arith.select %39, %42, %43 : vector<8x128xi1>, vector<8x128xf32>
    %45 = arith.addf %36, %44 : vector<8x128xf32>
    %46 = vector.extract_strided_slice %3 {offsets = [0, 4], sizes = [8, 1], strides = [1, 1]} : vector<8x8xi32> to vector<8x1xi32>
    %47 = vector.broadcast %46 : vector<8x1xi32> to vector<8x128xi32>
    %48 = arith.cmpi eq, %47, %8 : vector<8x128xi32>
    %49 = vector.extract_strided_slice %4 {offsets = [0, 4], sizes = [8, 1], strides = [1, 1]} : vector<8x8xf32> to vector<8x1xf32>
    %cst_8 = arith.constant 0.000000e+00 : f32
    %50 = vector.shape_cast %49 : vector<8x1xf32> to vector<8x1xf32>
    %51 = vector.broadcast %50 : vector<8x1xf32> to vector<8x128xf32>
    %52 = vector.broadcast %cst_8 : f32 to vector<8x128xf32>
    %53 = arith.select %48, %51, %52 : vector<8x128xi1>, vector<8x128xf32>
    %54 = arith.addf %45, %53 : vector<8x128xf32>
    %55 = vector.extract_strided_slice %3 {offsets = [0, 5], sizes = [8, 1], strides = [1, 1]} : vector<8x8xi32> to vector<8x1xi32>
    %56 = vector.broadcast %55 : vector<8x1xi32> to vector<8x128xi32>
    %57 = arith.cmpi eq, %56, %8 : vector<8x128xi32>
    %58 = vector.extract_strided_slice %4 {offsets = [0, 5], sizes = [8, 1], strides = [1, 1]} : vector<8x8xf32> to vector<8x1xf32>
    %cst_9 = arith.constant 0.000000e+00 : f32
    %59 = vector.shape_cast %58 : vector<8x1xf32> to vector<8x1xf32>
    %60 = vector.broadcast %59 : vector<8x1xf32> to vector<8x128xf32>
    %61 = vector.broadcast %cst_9 : f32 to vector<8x128xf32>
    %62 = arith.select %57, %60, %61 : vector<8x128xi1>, vector<8x128xf32>
    %63 = arith.addf %54, %62 : vector<8x128xf32>
    %64 = vector.extract_strided_slice %3 {offsets = [0, 6], sizes = [8, 1], strides = [1, 1]} : vector<8x8xi32> to vector<8x1xi32>
    %65 = vector.broadcast %64 : vector<8x1xi32> to vector<8x128xi32>
    %66 = arith.cmpi eq, %65, %8 : vector<8x128xi32>
    %67 = vector.extract_strided_slice %4 {offsets = [0, 6], sizes = [8, 1], strides = [1, 1]} : vector<8x8xf32> to vector<8x1xf32>
    %cst_10 = arith.constant 0.000000e+00 : f32
    %68 = vector.shape_cast %67 : vector<8x1xf32> to vector<8x1xf32>
    %69 = vector.broadcast %68 : vector<8x1xf32> to vector<8x128xf32>
    %70 = vector.broadcast %cst_10 : f32 to vector<8x128xf32>
    %71 = arith.select %66, %69, %70 : vector<8x128xi1>, vector<8x128xf32>
    %72 = arith.addf %63, %71 : vector<8x128xf32>
    %73 = vector.extract_strided_slice %3 {offsets = [0, 7], sizes = [8, 1], strides = [1, 1]} : vector<8x8xi32> to vector<8x1xi32>
    %74 = vector.broadcast %73 : vector<8x1xi32> to vector<8x128xi32>
    %75 = arith.cmpi eq, %74, %8 : vector<8x128xi32>
    %76 = vector.extract_strided_slice %4 {offsets = [0, 7], sizes = [8, 1], strides = [1, 1]} : vector<8x8xf32> to vector<8x1xf32>
    %cst_11 = arith.constant 0.000000e+00 : f32
    %77 = vector.shape_cast %76 : vector<8x1xf32> to vector<8x1xf32>
    %78 = vector.broadcast %77 : vector<8x1xf32> to vector<8x128xf32>
    %79 = vector.broadcast %cst_11 : f32 to vector<8x128xf32>
    %80 = arith.select %75, %78, %79 : vector<8x128xi1>, vector<8x128xf32>
    %81 = arith.addf %72, %80 : vector<8x128xf32>
    %c0_12 = arith.constant 0 : index
    %c0_13 = arith.constant 0 : index
    %82 = vector.load %arg8[%c0_12, %c0_13] : memref<8x128xf32, #tpu.memory_space<vmem>>, vector<8x128xf32>
    %83 = arith.truncf %81 : vector<8x128xf32> to vector<8x128xbf16>
    %c0_14 = arith.constant 0 : index
    %c0_15 = arith.constant 0 : index
    %84 = vector.load %arg4[%c0_14, %c0_15] : memref<128x128xbf16, #tpu.memory_space<vmem>>, vector<128x128xbf16>
    %cst_16 = arith.constant dense<0.000000e+00> : vector<8x128xf32>
    %85 = tpu.matmul %83, %84, %cst_16 {dimension_numbers = #tpu.dot_dimension_numbers<[1], [0], [0], [1], [0, 0, 1, 1], [], []>} : vector<8x128xbf16>, vector<128x128xbf16>, vector<8x128xf32> -> vector<8x128xf32>
    %86 = arith.addf %82, %85 : vector<8x128xf32>
    %c0_17 = arith.constant 0 : index
    %c0_18 = arith.constant 0 : index
    %87 = vector.load %arg8[%c0_17, %c0_18] : memref<8x128xf32, #tpu.memory_space<vmem>>, vector<8x128xf32>
    tpu.vector_store %arg8[%c0_17, %c0_18], %86 {strides = array<i32>} : memref<8x128xf32, #tpu.memory_space<vmem>>, vector<8x128xf32>,
    %c0_i32_19 = arith.constant 0 : i32
    %88 = arith.cmpi eq, %arg1, %c0_i32_19 : i32
    %89 = arith.extui %88 : i1 to i32
    %c0_i32_20 = arith.constant 0 : i32
    %90 = arith.cmpi ne, %89, %c0_i32_20 : i32
    scf.if %90 {
      %c0_21 = arith.constant 0 : index
      %c0_22 = arith.constant 0 : index
      %91 = vector.load %arg8[%c0_21, %c0_22] : memref<8x128xf32, #tpu.memory_space<vmem>>, vector<8x128xf32>
      %c0_23 = arith.constant 0 : index
      %c0_24 = arith.constant 0 : index
      %92 = vector.load %arg5[%c0_23, %c0_24] : memref<128x128xf32, #tpu.memory_space<vmem>>, vector<128x128xf32>
      %cst_25 = arith.constant dense<0.000000e+00> : vector<8x128xf32>
      %93 = tpu.matmul %91, %92, %cst_25 {dimension_numbers = #tpu.dot_dimension_numbers<[1], [0], [0], [1], [0, 0, 1, 1], [], []>} : vector<8x128xf32>, vector<128x128xf32>, vector<8x128xf32> -> vector<8x128xf32>
      %c0_26 = arith.constant 0 : index
      %c0_27 = arith.constant 0 : index
      %94 = vector.load %arg6[%c0_26, %c0_27] : memref<1x128xf32, #tpu.memory_space<vmem>>, vector<1x128xf32>
      %95 = vector.broadcast %94 : vector<1x128xf32> to vector<8x128xf32>
      %96 = arith.addf %93, %95 : vector<8x128xf32>
      %c0_28 = arith.constant 0 : index
      %c0_29 = arith.constant 0 : index
      %97 = vector.load %arg7[%c0_28, %c0_29] : memref<8x128xf32, #tpu.memory_space<vmem>>, vector<8x128xf32>
      tpu.vector_store %arg7[%c0_28, %c0_29], %96 {strides = array<i32>} : memref<8x128xf32, #tpu.memory_space<vmem>>, vector<8x128xf32>,
    } else {
    }
    return
  }
  func.func @transform_0(%arg0: i32, %arg1: i32) -> (i32, i32) {
    %c0_i32 = arith.constant 0 : i32
    %c0_i32_0 = arith.constant 0 : i32
    return %arg0, %c0_i32 : i32, i32
  }
  func.func @transform_1(%arg0: i32, %arg1: i32) -> (i32, i32) {
    %c0_i32 = arith.constant 0 : i32
    %c0_i32_0 = arith.constant 0 : i32
    return %arg0, %c0_i32 : i32, i32
  }
  func.func @transform_2(%arg0: i32, %arg1: i32) -> (i32, i32) {
    %c0_i32 = arith.constant 0 : i32
    %c0_i32_0 = arith.constant 0 : i32
    return %arg1, %c0_i32 : i32, i32
  }
  func.func @transform_3(%arg0: i32, %arg1: i32) -> (i32, i32) {
    %c0_i32 = arith.constant 0 : i32
    %c0_i32_0 = arith.constant 0 : i32
    %c0_i32_1 = arith.constant 0 : i32
    return %c0_i32, %c0_i32_0 : i32, i32
  }
  func.func @transform_4(%arg0: i32, %arg1: i32) -> (i32, i32) {
    %c0_i32 = arith.constant 0 : i32
    %c0_i32_0 = arith.constant 0 : i32
    %c0_i32_1 = arith.constant 0 : i32
    return %c0_i32, %c0_i32_0 : i32, i32
  }
  func.func @transform_5(%arg0: i32, %arg1: i32) -> (i32, i32) {
    %c0_i32 = arith.constant 0 : i32
    %c0_i32_0 = arith.constant 0 : i32
    return %arg0, %c0_i32 : i32, i32
  }
}

</mosaic_0001>

<llo_original>
// kernel: encoder_forward.1
$region0: #{encoder_forward.1}
  #allocation0 [shape = 'u32[]', space=smem, size = 0x4, offset = 0x4, fixed_abs, tag = 'smem constant byte address 0x4 - core index']
  #allocation1 [shape = 'u32[144,128]{1,0:T(1,128)}', space=vmem, size = 0x12000, scoped, tag = 'internal scratch']
  #allocation2 [shape = 'f32[8,128]{1,0:T(8,128)}', space=vmem, size = 0x1000, scoped, tag = 'scratch operand']
  %s0 = inlined_call_operand.vmem [shape: s32[8,8], index: 0, kind: input, shape index: {}]
  %s1 = inlined_call_operand.vmem [shape: f32[8,8], index: 1, kind: input, shape index: {}]
  %s2 = inlined_call_operand.vmem [shape: bf16[128,128], index: 2, kind: input, shape index: {}]
  %s3 = inlined_call_operand.vmem [shape: f32[128,128], index: 3, kind: input, shape index: {}]
  %s4 = inlined_call_operand.vmem [shape: f32[1,128], index: 4, kind: input, shape index: {}]
  %s5 = inlined_call_operand.vmem [shape: f32[8,128], index: 5, kind: output, shape index: {}]
  %s6 = sld [smem:[#allocation0]]
  $region38: #{encoder_forward.1} parent=0
    _
  %s8 = ssub.s32 1, %s6
  %s9 = scalar_select 0, %s8, %s6
  // Predicated region
  $region2: #{encoder_forward.1} parent=0 // pred_check
    _
  $region3: #{encoder_forward.1} parent=0 // pred_check_branch
    %11 = sbr.rel (0) target = $region5
  $region4: #{encoder_forward.1} parent=0 // pred_region
    _
  $region5: #{encoder_forward.1} parent=0 // pred_fallthru
    _
  // Predicated region
  $region6: #{encoder_forward.1} parent=0 // pred_check
    _
  $region7: #{encoder_forward.1} parent=0 // pred_check_branch
    %13 = sbr.rel (0) target = $region9
  $region8: #{encoder_forward.1} parent=0 // pred_region
    _
  $region9: #{encoder_forward.1} parent=0 // pred_fallthru
    _
  // Predicated region
  $region10: #{encoder_forward.1} parent=0 // pred_check
    _
  $region11: #{encoder_forward.1} parent=0 // pred_check_branch
    %15 = sbr.rel (0) target = $region13
  $region12: #{encoder_forward.1} parent=0 // pred_region
    _
  $region13: #{encoder_forward.1} parent=0 // pred_fallthru
    _
  // Predicated region
  $region14: #{encoder_forward.1} parent=0 // pred_check
    _
  $region15: #{encoder_forward.1} parent=0 // pred_check_branch
    %17 = sbr.rel (0) target = $region17
  $region16: #{encoder_forward.1} parent=0 // pred_region
    _
  $region17: #{encoder_forward.1} parent=0 // pred_fallthru
    _
  // Predicated region
  $region18: #{encoder_forward.1} parent=0 // pred_check
    _
  $region19: #{encoder_forward.1} parent=0 // pred_check_branch
    %19 = sbr.rel (0) target = $region21
  $region20: #{encoder_forward.1} parent=0 // pred_region
    _
  $region21: #{encoder_forward.1} parent=0 // pred_fallthru
    _
  %p21 = scmp.eq.s32.totalorder 0, 0
  // Predicated region
  $region22: #{encoder_forward.1} parent=0 // pred_check
    %p22 = pneg %p21
  $region23: #{encoder_forward.1} parent=0 // pred_check_branch
    %24 = sbr.rel (%p22) target = $region25
  $region24: #{encoder_forward.1} parent=0 // pred_region
    %25 = vst [vmem:[#allocation2] sm:$0xff] 0.0
  $region25: #{encoder_forward.1} parent=0 // pred_fallthru
    _
  %v26 = vld [vmem:[%s0] sm:$0xff]
  %v27 = vld [vmem:[%s1] sm:$0xff]
  %s28 = smul.u32 0, 128
  %v29 = vlaneseq
  %v30 = vand.u32 %v29, 127
  %v31 = vstv %s28
  %v32 = vadd.s32 %v31, %v30
  %33 = vset.pattern.permute.xlu0 0
  %34 = vperm.xlu0 %33, %v26
  %v35 = vpop.permute.xlu0 %34
  %vm36 = vcmp.eq.s32.totalorder %v35, %v32
  %38 = vset.pattern.permute.xlu0 0
  %39 = vperm.xlu0 %38, %v27
  %v40 = vpop.permute.xlu0 %39
  %v42 = vsel %vm36, %v40, 0.0
  %v43 = vadd.f32 %v42, 0.0
  %44 = vset.pattern.permute.xlu0 1
  %45 = vperm.xlu0 %44, %v26
  %v46 = vpop.permute.xlu0 %45
  %vm47 = vcmp.eq.s32.totalorder %v46, %v32
  %48 = vset.pattern.permute.xlu0 1
  %49 = vperm.xlu0 %48, %v27
  %v50 = vpop.permute.xlu0 %49
  %v52 = vsel %vm47, %v50, 0.0
  %v53 = vadd.f32 %v43, %v52
  %54 = vset.pattern.permute.xlu0 2
  %55 = vperm.xlu0 %54, %v26
  %v56 = vpop.permute.xlu0 %55
  %vm57 = vcmp.eq.s32.totalorder %v56, %v32
  %58 = vset.pattern.permute.xlu0 2
  %59 = vperm.xlu0 %58, %v27
  %v60 = vpop.permute.xlu0 %59
  %v62 = vsel %vm57, %v60, 0.0
  %v63 = vadd.f32 %v53, %v62
  %64 = vset.pattern.permute.xlu0 3
  %65 = vperm.xlu0 %64, %v26
  %v66 = vpop.permute.xlu0 %65
  %vm67 = vcmp.eq.s32.totalorder %v66, %v32
  %68 = vset.pattern.permute.xlu0 3
  %69 = vperm.xlu0 %68, %v27
  %v70 = vpop.permute.xlu0 %69
  %v72 = vsel %vm67, %v70, 0.0
  %v73 = vadd.f32 %v63, %v72
  %74 = vset.pattern.permute.xlu0 4
  %75 = vperm.xlu0 %74, %v26
  %v76 = vpop.permute.xlu0 %75
  %vm77 = vcmp.eq.s32.totalorder %v76, %v32
  %78 = vset.pattern.permute.xlu0 4
  %79 = vperm.xlu0 %78, %v27
  %v80 = vpop.permute.xlu0 %79
  %v82 = vsel %vm77, %v80, 0.0
  %v83 = vadd.f32 %v73, %v82
  %84 = vset.pattern.permute.xlu0 5
  %85 = vperm.xlu0 %84, %v26
  %v86 = vpop.permute.xlu0 %85
  %vm87 = vcmp.eq.s32.totalorder %v86, %v32
  %88 = vset.pattern.permute.xlu0 5
  %89 = vperm.xlu0 %88, %v27
  %v90 = vpop.permute.xlu0 %89
  %v92 = vsel %vm87, %v90, 0.0
  %v93 = vadd.f32 %v83, %v92
  %94 = vset.pattern.permute.xlu0 6
  %95 = vperm.xlu0 %94, %v26
  %v96 = vpop.permute.xlu0 %95
  %vm97 = vcmp.eq.s32.totalorder %v96, %v32
  %98 = vset.pattern.permute.xlu0 6
  %99 = vperm.xlu0 %98, %v27
  %v100 = vpop.permute.xlu0 %99
  %v102 = vsel %vm97, %v100, 0.0
  %v103 = vadd.f32 %v93, %v102
  %104 = vset.pattern.permute.xlu0 7
  %105 = vperm.xlu0 %104, %v26
  %v106 = vpop.permute.xlu0 %105
  %vm107 = vcmp.eq.s32.totalorder %v106, %v32
  %108 = vset.pattern.permute.xlu0 7
  %109 = vperm.xlu0 %108, %v27
  %v110 = vpop.permute.xlu0 %109
  %v112 = vsel %vm107, %v110, 0.0
  %v113 = vadd.f32 %v103, %v112
  %v114 = vld [vmem:[#allocation2] sm:$0xff]
  %v115 = vpack.c.bf16 %v113, %v113
  %v116 = vld [vmem:[%s2] sm:$0xf]
  %v117 = vld [vmem:[%s2 + $0x4] sm:$0xf]
  %v118 = vld [vmem:[%s2 + $0x8] sm:$0xf]
  %v119 = vld [vmem:[%s2 + $0xc] sm:$0xf]
  %v120 = vld [vmem:[%s2 + $0x10] sm:$0xf]
  %v121 = vld [vmem:[%s2 + $0x14] sm:$0xf]
  %v122 = vld [vmem:[%s2 + $0x18] sm:$0xf]
  %v123 = vld [vmem:[%s2 + $0x1c] sm:$0xf]
  %v124 = vld [vmem:[%s2 + $0x20] sm:$0xf]
  %v125 = vld [vmem:[%s2 + $0x24] sm:$0xf]
  %v126 = vld [vmem:[%s2 + $0x28] sm:$0xf]
  %v127 = vld [vmem:[%s2 + $0x2c] sm:$0xf]
  %v128 = vld [vmem:[%s2 + $0x30] sm:$0xf]
  %v129 = vld [vmem:[%s2 + $0x34] sm:$0xf]
  %v130 = vld [vmem:[%s2 + $0x38] sm:$0xf]
  %v131 = vld [vmem:[%s2 + $0x3c] sm:$0xf]
  %v148 = vunpack.c.l.b16 %v116
  %v149 = vunpack.c.l.b16 %v117
  %v150 = vunpack.c.l.b16 %v118
  %v151 = vunpack.c.l.b16 %v119
  %v152 = vunpack.c.l.b16 %v120
  %v153 = vunpack.c.l.b16 %v121
  %v154 = vunpack.c.l.b16 %v122
  %v155 = vunpack.c.l.b16 %v123
  %v156 = vunpack.c.l.b16 %v124
  %v157 = vunpack.c.l.b16 %v125
  %v158 = vunpack.c.l.b16 %v126
  %v159 = vunpack.c.l.b16 %v127
  %v160 = vunpack.c.l.b16 %v128
  %v161 = vunpack.c.l.b16 %v129
  %v162 = vunpack.c.l.b16 %v130
  %v163 = vunpack.c.l.b16 %v131
  %v164 = vpack.c.b16 %v149, %v148
  %v165 = vpack.c.b16 %v151, %v150
  %v166 = vpack.c.b16 %v153, %v152
  %v167 = vpack.c.b16 %v155, %v154
  %v168 = vpack.c.b16 %v157, %v156
  %v169 = vpack.c.b16 %v159, %v158
  %v170 = vpack.c.b16 %v161, %v160
  %v171 = vpack.c.b16 %v163, %v162
  %180 = vmatprep.subr.bf16.mxu0 0
  %181 = vmatpush1.bf16.msra.mxu0 %v164
  %182 = vmatprep.subr.bf16.mxu0 0
  %183 = vmatpush1.bf16.msra.mxu0 %v165
  %184 = vmatprep.subr.bf16.mxu0 0
  %185 = vmatpush1.bf16.msra.mxu0 %v166
  %186 = vmatprep.subr.bf16.mxu0 0
  %187 = vmatpush1.bf16.msra.mxu0 %v167
  %188 = vmatprep.subr.bf16.mxu0 0
  %189 = vmatpush1.bf16.msra.mxu0 %v168
  %190 = vmatprep.subr.bf16.mxu0 0
  %191 = vmatpush1.bf16.msra.mxu0 %v169
  %192 = vmatprep.subr.bf16.mxu0 0
  %193 = vmatpush1.bf16.msra.mxu0 %v170
  %194 = vmatprep.subr.bf16.mxu0 0
  %195 = vmatpush1.bf16.msra.mxu0 %v171
  %196 = vmatprep.subr.bf16.mxu0 0
  %197 = vmatpush1.bf16.msra.mxu0 0
  %198 = vmatprep.subr.bf16.mxu0 0
  %199 = vmatpush1.bf16.msra.mxu0 0
  %200 = vmatprep.subr.bf16.mxu0 0
  %201 = vmatpush1.bf16.msra.mxu0 0
  %202 = vmatprep.subr.bf16.mxu0 0
  %203 = vmatpush1.bf16.msra.mxu0 0
  %204 = vmatprep.subr.bf16.mxu0 0
  %205 = vmatpush1.bf16.msra.mxu0 0
  %206 = vmatprep.subr.bf16.mxu0 0
  %207 = vmatpush1.bf16.msra.mxu0 0
  %208 = vmatprep.subr.bf16.mxu0 0
  %209 = vmatpush1.bf16.msra.mxu0 0
  %210 = vmatprep.subr.bf16.mxu0 0
  %211 = vmatpush1.bf16.msra.mxu0 0
  %212 = vmatprep.mubr.bf16.mxu0 0
  %213 = vmatmul.mubr.bf16.gmra.mrb[0].mxu0 %v115
  %v214 = vpop.f32.mrb[0].mxu0
  %v215 = vadd.f32 0.0, %v214
  %v216 = vpop.f32.mrb[0].mxu0
  %v217 = vpop.f32.mrb[0].mxu0
  %v218 = vpop.f32.mrb[0].mxu0
  %219 = vdwg.mxu0
  %v220 = vadd.f32 %v114, %v215
  %221 = vst [vmem:[#allocation2] sm:$0xff] %v220
  // Predicated region
  $region26: #{encoder_forward.1} parent=0 // pred_check
    %p222 = pneg %p21
  $region27: #{encoder_forward.1} parent=0 // pred_check_branch
    %224 = sbr.rel (%p222) target = $region29
  $region28: #{encoder_forward.1} parent=0 // pred_region
    %v225 = vld [vmem:[#allocation2] sm:$0xff]
    %v226 = vld [vmem:[%s3] sm:$0xff]
    %v227 = vld [vmem:[%s3 + $0x8] sm:$0xff]
    %v228 = vld [vmem:[%s3 + $0x10] sm:$0xff]
    %v229 = vld [vmem:[%s3 + $0x18] sm:$0xff]
    %v230 = vld [vmem:[%s3 + $0x20] sm:$0xff]
    %v231 = vld [vmem:[%s3 + $0x28] sm:$0xff]
    %v232 = vld [vmem:[%s3 + $0x30] sm:$0xff]
    %v233 = vld [vmem:[%s3 + $0x38] sm:$0xff]
    %v234 = vld [vmem:[%s3 + $0x40] sm:$0xff]
    %v235 = vld [vmem:[%s3 + $0x48] sm:$0xff]
    %v236 = vld [vmem:[%s3 + $0x50] sm:$0xff]
    %v237 = vld [vmem:[%s3 + $0x58] sm:$0xff]
    %v238 = vld [vmem:[%s3 + $0x60] sm:$0xff]
    %v239 = vld [vmem:[%s3 + $0x68] sm:$0xff]
    %v240 = vld [vmem:[%s3 + $0x70] sm:$0xff]
    %v241 = vld [vmem:[%s3 + $0x78] sm:$0xff]
    %v242 = vld [vmem:[%s4] sm:$0x1]
    %v244 = vlaneseq
    %v245 = vshrl.u32 %v244, 7
    %v246 = vsub.s32 0, %v245
    %v247 = vrot.slane %v242, %v246
    %249 = vmatprep.subr.mxu0 0.0
    %250 = vmatpush1.msra.mxu0 %v226
    %251 = vmatprep.subr.mxu0 0.0
    %252 = vmatpush1.msra.mxu0 %v227
    %253 = vmatprep.subr.mxu0 0.0
    %254 = vmatpush1.msra.mxu0 %v228
    %255 = vmatprep.subr.mxu0 0.0
    %256 = vmatpush1.msra.mxu0 %v229
    %257 = vmatprep.subr.mxu0 0.0
    %258 = vmatpush1.msra.mxu0 %v230
    %259 = vmatprep.subr.mxu0 0.0
    %260 = vmatpush1.msra.mxu0 %v231
    %261 = vmatprep.subr.mxu0 0.0
    %262 = vmatpush1.msra.mxu0 %v232
    %263 = vmatprep.subr.mxu0 0.0
    %264 = vmatpush1.msra.mxu0 %v233
    %265 = vmatprep.subr.mxu0 0.0
    %266 = vmatpush1.msra.mxu0 %v234
    %267 = vmatprep.subr.mxu0 0.0
    %268 = vmatpush1.msra.mxu0 %v235
    %269 = vmatprep.subr.mxu0 0.0
    %270 = vmatpush1.msra.mxu0 %v236
    %271 = vmatprep.subr.mxu0 0.0
    %272 = vmatpush1.msra.mxu0 %v237
    %273 = vmatprep.subr.mxu0 0.0
    %274 = vmatpush1.msra.mxu0 %v238
    %275 = vmatprep.subr.mxu0 0.0
    %276 = vmatpush1.msra.mxu0 %v239
    %277 = vmatprep.subr.mxu0 0.0
    %278 = vmatpush1.msra.mxu0 %v240
    %279 = vmatprep.subr.mxu0 0.0
    %280 = vmatpush1.msra.mxu0 %v241
    %281 = vmatprep.subr.mxu0 0.0
    %282 = vmatpush1.msra.mxu0 0.0
    %283 = vmatprep.subr.mxu0 0.0
    %284 = vmatpush1.msra.mxu0 0.0
    %285 = vmatprep.subr.mxu0 0.0
    %286 = vmatpush1.msra.mxu0 0.0
    %287 = vmatprep.subr.mxu0 0.0
    %288 = vmatpush1.msra.mxu0 0.0
    %289 = vmatprep.subr.mxu0 0.0
    %290 = vmatpush1.msra.mxu0 0.0
    %291 = vmatprep.subr.mxu0 0.0
    %292 = vmatpush1.msra.mxu0 0.0
    %293 = vmatprep.subr.mxu0 0.0
    %294 = vmatpush1.msra.mxu0 0.0
    %295 = vmatprep.subr.mxu0 0.0
    %296 = vmatpush1.msra.mxu0 0.0
    %297 = vmatprep.subr.mxu0 0.0
    %298 = vmatpush1.msra.mxu0 0.0
    %299 = vmatprep.subr.mxu0 0.0
    %300 = vmatpush1.msra.mxu0 0.0
    %301 = vmatprep.subr.mxu0 0.0
    %302 = vmatpush1.msra.mxu0 0.0
    %303 = vmatprep.subr.mxu0 0.0
    %304 = vmatpush1.msra.mxu0 0.0
    %305 = vmatprep.subr.mxu0 0.0
    %306 = vmatpush1.msra.mxu0 0.0
    %307 = vmatprep.subr.mxu0 0.0
    %308 = vmatpush1.msra.mxu0 0.0
    %309 = vmatprep.subr.mxu0 0.0
    %310 = vmatpush1.msra.mxu0 0.0
    %311 = vmatprep.subr.mxu0 0.0
    %312 = vmatpush1.msra.mxu0 0.0
    %313 = vmatprep.mubr.f32.mxu0 0.0
    %314 = vmatmul.mubr.f32.gmra.mrb[0].mxu0 %v225
    %v315 = vpop.f32.mrb[0].mxu0
    %v316 = vadd.f32 %v247, %v315
    %v317 = vpop.f32.mrb[0].mxu0
    %318 = vdwg.mxu0
    %319 = vst [vmem:[%s5] sm:$0xff] %v316
  $region29: #{encoder_forward.1} parent=0 // pred_fallthru
    _
  // Predicated region
  $region30: #{encoder_forward.1} parent=0 // pred_check
    _
  $region31: #{encoder_forward.1} parent=0 // pred_check_branch
    %321 = sbr.rel (0) target = $region33
  $region32: #{encoder_forward.1} parent=0 // pred_region
    _
  $region33: #{encoder_forward.1} parent=0 // pred_fallthru
    _
  // Predicated region
  $region34: #{encoder_forward.1} parent=0 // pred_check
    _
  $region35: #{encoder_forward.1} parent=0 // pred_check_branch
    %323 = sbr.rel (0) target = $region37
  $region36: #{encoder_forward.1} parent=0 // pred_region
    _
  $region37: #{encoder_forward.1} parent=0 // pred_fallthru
    _

</llo_original>
